<compile_context>
chip_gen: v5e
topology: v5e:2x2
jax: 0.10.0
libtpu: 0.0.40
codegen_flags: <defaults>
</compile_context>

<pallas_src>
import jax
import jax.numpy as jnp
from jax.experimental import pallas as pl
from jax.experimental.pallas import tpu as pltpu

_N_OUT = 8  # raw-sum lanes: [kl, bbox_mse, lmk_mse, ce, bbox_sl1, lmk_sl1, 0, 0]


def _cdiv(a, b):
    return -(-a // b)


def _round_up(x, m):
    return _cdiv(x, m) * m


def _make_kernel(with_targets, n_cls, tile_b, steps_per_core, batch,
                 temperature):
    """Fused per-block kernel: all loss partial sums in one pass."""
    inv_t = 1.0 / float(temperature)

    def kernel(*refs):
        if with_targets:
            (cls_s_ref, cls_t_ref, bb_s_ref, bb_t_ref, lm_s_ref, lm_t_ref,
             tgt_ref, bb_tgt_ref, lm_tgt_ref, out_ref,
             kl_acc, bb_acc, lm_acc, ce_acc, tbb_acc, tlm_acc) = refs
        else:
            (cls_s_ref, cls_t_ref, bb_s_ref, bb_t_ref, lm_s_ref, lm_t_ref,
             out_ref, kl_acc, bb_acc, lm_acc) = refs

        step = pl.program_id(1)

        @pl.when(step == 0)
        def _init():
            kl_acc[...] = jnp.zeros_like(kl_acc)
            bb_acc[...] = jnp.zeros_like(bb_acc)
            lm_acc[...] = jnp.zeros_like(lm_acc)
            if with_targets:
                ce_acc[...] = jnp.zeros_like(ce_acc)
                tbb_acc[...] = jnp.zeros_like(tbb_acc)
                tlm_acc[...] = jnp.zeros_like(tlm_acc)

        # Row-validity mask for the ragged batch tail / clamped overshoot
        # steps.  The index_map clamps the DMA in-bounds; validity is decided
        # by the *unclamped* global step, so duplicated blocks contribute 0.
        gstep = pl.program_id(0) * steps_per_core + step
        row = jax.lax.broadcasted_iota(jnp.int32, (tile_b, 1), 0)
        valid = (gstep * tile_b + row) < batch              # (tile_b, 1) bool

        def fold(acc_ref, y):
            # (tile_b, d) -> (tile_b//8, 8, d) splits only the sublane axis
            # (layout-preserving), so the axis-0 sum is pure VPU adds; the
            # XLU reduction trees are deferred to the finalize step.
            r, d = y.shape
            acc_ref[...] += jnp.sum(y.reshape(r // 8, 8, d), axis=0)

        # ---- loads (cast to f32 per tile; inputs may be bf16) -----------
        cs = cls_s_ref[...].astype(jnp.float32)
        ct = cls_t_ref[...].astype(jnp.float32)
        bs = bb_s_ref[...].astype(jnp.float32)
        bt = bb_t_ref[...].astype(jnp.float32)
        ls = lm_s_ref[...].astype(jnp.float32)
        lt = lm_t_ref[...].astype(jnp.float32)

        # ---- KL(teacher || student) at temperature T (raw sum) ----------
        zt = ct * inv_t
        zt = zt - jnp.max(zt, axis=1, keepdims=True)
        et = jnp.exp(zt)
        st = jnp.sum(et, axis=1, keepdims=True)
        log_pt = zt - jnp.log(st)

        zs = cs * inv_t
        zs = zs - jnp.max(zs, axis=1, keepdims=True)
        es = jnp.exp(zs)
        ss = jnp.sum(es, axis=1, keepdims=True)
        log_qs = zs - jnp.log(ss)

        inv_st = 1.0 / st                       # one reciprocal per row
        fold(kl_acc, jnp.where(valid, et * (log_pt - log_qs) * inv_st, 0.0))

        # ---- distillation MSE (masked diff -> padded rows give 0) -------
        dbb = jnp.where(valid, bs - bt, 0.0)
        fold(bb_acc, dbb * dbb)
        dlm = jnp.where(valid, ls - lt, 0.0)
        fold(lm_acc, dlm * dlm)

        if with_targets:
            # cross-entropy (T = 1) via one-hot; invalid rows masked out
            z1 = cs - jnp.max(cs, axis=1, keepdims=True)
            log_q1 = z1 - jnp.log(jnp.sum(jnp.exp(z1), axis=1, keepdims=True))
            col = jax.lax.broadcasted_iota(jnp.int32, (tile_b, n_cls), 1)
            hit = (col == tgt_ref[...]) & valid
            fold(ce_acc, jnp.where(hit, -log_q1, 0.0))

            def huber(d):
                a = jnp.abs(d)
                return jnp.where(a < 1.0, 0.5 * d * d, a - 0.5)

            fold(tbb_acc, huber(jnp.where(
                valid, bs - bb_tgt_ref[...].astype(jnp.float32), 0.0)))
            fold(tlm_acc, huber(jnp.where(
                valid, ls - lm_tgt_ref[...].astype(jnp.float32), 0.0)))

        # ---- finalize: one reduction tree per core, single vector store --
        @pl.when(step == pl.num_programs(1) - 1)
        def _finalize():
            totals = [jnp.sum(kl_acc[...]), jnp.sum(bb_acc[...]),
                      jnp.sum(lm_acc[...])]
            if with_targets:
                totals += [jnp.sum(ce_acc[...]), jnp.sum(tbb_acc[...]),
                           jnp.sum(tlm_acc[...])]
            lane = jax.lax.broadcasted_iota(jnp.int32, (1, 1, _N_OUT), 2)
            vec = jnp.zeros((1, 1, _N_OUT), jnp.float32)
            for idx, t in enumerate(totals):
                vec = vec + jnp.where(lane == idx, t, 0.0)
            out_ref[...] = vec

    return kernel


class WeightedKnowledgeDistillation:
    """JAX/Pallas port of the PyTorch WeightedKnowledgeDistillation module."""

    def __init__(self, temperature=4.0, alpha=0.7, adaptive_weights=True,
                 vmem_budget_bytes=24 * 1024 * 1024,
                 vmem_limit_bytes=40 * 1024 * 1024,
                 max_batch_tile=None, num_cores=2):
        self.temperature = float(temperature)
        self.alpha = float(alpha)
        self.adaptive_weights = adaptive_weights
        # nn.Parameter init values from __init__ (deterministic, no checkpoint)
        self.cls_weight = 1.0
        self.bbox_weight = 1.0
        self.landmark_weight = 0.8
        self.vmem_budget_bytes = int(vmem_budget_bytes)   # operand double-buffers
        self.vmem_limit_bytes = int(vmem_limit_bytes)     # explicit scoped limit
        self.max_batch_tile = max_batch_tile              # test override
        self.num_cores = int(num_cores)                   # v7x: 2 TensorCores

    def __call__(self, student_outputs, teacher_outputs, targets=None):
        cls_s, bb_s, lm_s = student_outputs
        cls_t, bb_t, lm_t = teacher_outputs
        with_targets = targets is not None

        B, C = cls_s.shape
        Dbb = bb_s.shape[1]
        Dlm = lm_s.shape[1]

        # ---- tile size from the VMEM double-buffer budget ----------------
        # Every operand block lane-pads its last dim to 128 in VMEM
        # (including the (tile_b, 1) int32 target block).
        def lanes(d):
            return _round_up(d, 128)

        row_lanes = 2 * lanes(C) + 2 * lanes(Dbb) + 2 * lanes(Dlm)
        if with_targets:
            row_lanes += lanes(1) + lanes(Dbb) + lanes(Dlm)
        bytes_per_row = row_lanes * 4 * 2          # f32/i32, double-buffered
        cap = max(128, (self.vmem_budget_bytes // bytes_per_row) // 128 * 128)
        if self.max_batch_tile is not None:
            cap = min(cap, max(8, _round_up(int(self.max_batch_tile), 8)))
        tile_b = min(cap, _round_up(B, 8))

        n_blocks = _cdiv(B, tile_b)
        num_cores = self.num_cores if n_blocks >= self.num_cores else 1
        steps_per_core = _cdiv(n_blocks, num_cores)
        last_block = n_blocks - 1
        grid = (num_cores, steps_per_core)

        # Batch-sliced operands share one clamped index map; overshoot steps
        # re-read the last block but are fully masked in-kernel.
        def bmap(c, i):
            return (jnp.minimum(c * steps_per_core + i, last_block), 0)

        cls_spec = pl.BlockSpec((tile_b, C), bmap)
        bb_spec = pl.BlockSpec((tile_b, Dbb), bmap)
        lm_spec = pl.BlockSpec((tile_b, Dlm), bmap)
        out_spec = pl.BlockSpec((1, 1, _N_OUT), lambda c, i: (c, 0, 0))

        operands = [cls_s, cls_t, bb_s, bb_t, lm_s, lm_t]
        in_specs = [cls_spec, cls_spec, bb_spec, bb_spec, lm_spec, lm_spec]
        scratch = [pltpu.VMEM((8, C), jnp.float32),
                   pltpu.VMEM((8, Dbb), jnp.float32),
                   pltpu.VMEM((8, Dlm), jnp.float32)]

        if with_targets:
            cls_tgt, bb_tgt, lm_tgt = targets
            tgt2d = jnp.reshape(cls_tgt.astype(jnp.int32), (B, 1))  # free view
            operands += [tgt2d, bb_tgt, lm_tgt]
            in_specs += [pl.BlockSpec((tile_b, 1), bmap), bb_spec, lm_spec]
            scratch += [pltpu.VMEM((8, C), jnp.float32),
                        pltpu.VMEM((8, Dbb), jnp.float32),
                        pltpu.VMEM((8, Dlm), jnp.float32)]

        kernel = _make_kernel(with_targets, C, tile_b, steps_per_core, B,
                              self.temperature)

        out = pl.pallas_call(
            kernel,
            out_shape=jax.ShapeDtypeStruct((num_cores, 1, _N_OUT), jnp.float32),
            grid=grid,
            in_specs=in_specs,
            out_specs=out_spec,
            scratch_shapes=scratch,
            compiler_params=pltpu.CompilerParams(
                dimension_semantics=("parallel", "arbitrary"),
                vmem_limit_bytes=self.vmem_limit_bytes),
        )(*operands)

        # combine per-core raw sums, then apply means / T^2 / loss weights
        sums = jnp.sum(out[:, 0, :], axis=0)
        T = self.temperature
        kl = sums[0] * (T * T / B)
        bb = sums[1] / (B * Dbb)
        lm = sums[2] / (B * Dlm)
        wc = self.cls_weight * kl
        wb = self.bbox_weight * bb
        wl = self.landmark_weight * lm
        tot = wc + wb + wl
        losses = {"distill_cls": wc, "distill_bbox": wb,
                  "distill_landmark": wl, "distill_total": tot}

        if with_targets:
            ce = sums[3] / B
            tbb = sums[4] / (B * Dbb)
            tlm = sums[5] / (B * Dlm)
            ttot = ce + tbb + tlm
            losses.update({
                "task_cls": ce, "task_bbox": tbb, "task_landmark": tlm,
                "task_total": ttot,
                "combined": self.alpha * tot + (1.0 - self.alpha) * ttot,
            })
        return losses


# --------------------------- validation helpers ---------------------------

def _reference(module, student, teacher, targets):
    """Pure-JAX reference of the PyTorch forward, for validation."""
    cls_s, bb_s, lm_s = student
    cls_t, bb_t, lm_t = teacher
    T = module.temperature
    p_t = jax.nn.softmax(cls_t / T, axis=1)
    log_q = jax.nn.log_softmax(cls_s / T, axis=1)
    kl = jnp.sum(p_t * (jnp.log(p_t) - log_q)) / cls_s.shape[0] * T ** 2
    bb = jnp.mean((bb_s - bb_t) ** 2)
    lm = jnp.mean((lm_s - lm_t) ** 2)
    wc = module.cls_weight * kl
    wb = module.bbox_weight * bb
    wl = module.landmark_weight * lm
    out = {"distill_cls": wc, "distill_bbox": wb, "distill_landmark": wl,
           "distill_total": wc + wb + wl}
    if targets is not None:
        cls_tgt, bb_tgt, lm_tgt = targets
        lsm = jax.nn.log_softmax(cls_s, axis=1)
        ce = -jnp.mean(jnp.take_along_axis(lsm, cls_tgt[:, None], axis=1))

        def sl1(d):
            a = jnp.abs(d)
            return jnp.mean(jnp.where(a < 1.0, 0.5 * d * d, a - 0.5))

        tbb = sl1(bb_s - bb_tgt)
        tlm = sl1(lm_s - lm_tgt)
        ttot = ce + tbb + tlm
        out.update({"task_cls": ce, "task_bbox": tbb, "task_landmark": tlm,
                    "task_total": ttot,
                    "combined": module.alpha * out["distill_total"]
                               + (1 - module.alpha) * ttot})
    return out


def _make_inputs(key, batch, n_cls):
    ks = jax.random.split(key, 9)
    cls_s = jax.random.normal(ks[0], (batch, n_cls), jnp.float32)
    cls_t = jax.random.normal(ks[1], (batch, n_cls), jnp.float32)
    bb_s = jax.random.normal(ks[2], (batch, 4), jnp.float32)
    bb_t = jax.random.normal(ks[3], (batch, 4), jnp.float32)
    lm_s = jax.random.normal(ks[4], (batch, 10), jnp.float32)
    lm_t = jax.random.normal(ks[5], (batch, 10), jnp.float32)
    cls_tgt = jax.random.randint(ks[6], (batch,), 0, n_cls, jnp.int32)
    bb_tgt = jax.random.normal(ks[7], (batch, 4), jnp.float32)
    lm_tgt = jax.random.normal(ks[8], (batch, 10), jnp.float32)
    return ([cls_s, bb_s, lm_s], [cls_t, bb_t, lm_t],
            [cls_tgt, bb_tgt, lm_tgt])


def _check(got, ref):
    assert set(got.keys()) == set(ref.keys())
    for k in ref:
        assert jnp.allclose(got[k], ref[k], rtol=1e-4, atol=1e-5), (
            k, got[k], ref[k])


if __name__ == "__main__":
    key = jax.random.PRNGKey(0)
    k1, k2 = jax.random.split(key)

    # Case 1: small batch -> single block, single core; with & without targets.
    student, teacher, targets = _make_inputs(k1, batch=8, n_cls=16)
    module = WeightedKnowledgeDistillation(temperature=4.0, alpha=0.7,
                                           adaptive_weights=True)
    losses = jax.block_until_ready(module(student, teacher, targets))
    _check(losses, _reference(module, student, teacher, targets))

    losses_nt = jax.block_until_ready(module(student, teacher, None))
    _check(losses_nt, _reference(module, student, teacher, None))

    # Case 2: B=40 with a forced 16-row tile -> 3 batch blocks split over the
    # 2-"core" parallel axis (ragged masked tail + clamped overshoot step +
    # per-core partial-sum combination in the wrapper).
    student2, teacher2, targets2 = _make_inputs(k2, batch=40, n_cls=16)
    module2 = WeightedKnowledgeDistillation(temperature=4.0, alpha=0.7,
                                            adaptive_weights=True,
                                            max_batch_tile=16)
    losses2 = jax.block_until_ready(module2(student2, teacher2, targets2))
    _check(losses2, _reference(module2, student2, teacher2, targets2))

    print("KERNEL_OK")
</pallas_src>

<mosaic_0001>
module attributes {stable_mosaic.version = 11 : i64} {
  func.func @kernel(%arg0: i32, %arg1: i32, %arg2: memref<8x16xf32, #tpu.memory_space<vmem>>, %arg3: memref<8x16xf32, #tpu.memory_space<vmem>>, %arg4: memref<8x4xf32, #tpu.memory_space<vmem>>, %arg5: memref<8x4xf32, #tpu.memory_space<vmem>>, %arg6: memref<8x10xf32, #tpu.memory_space<vmem>>, %arg7: memref<8x10xf32, #tpu.memory_space<vmem>>, %arg8: memref<8x1xi32, #tpu.memory_space<vmem>>, %arg9: memref<8x4xf32, #tpu.memory_space<vmem>>, %arg10: memref<8x10xf32, #tpu.memory_space<vmem>>, %arg11: memref<1x1x8xf32, #tpu.memory_space<vmem>>, %arg12: memref<8x16xf32, #tpu.memory_space<vmem>>, %arg13: memref<8x4xf32, #tpu.memory_space<vmem>>, %arg14: memref<8x10xf32, #tpu.memory_space<vmem>>, %arg15: memref<8x16xf32, #tpu.memory_space<vmem>>, %arg16: memref<8x4xf32, #tpu.memory_space<vmem>>, %arg17: memref<8x10xf32, #tpu.memory_space<vmem>>) attributes {dimension_semantics = [#tpu.dimension_semantics<parallel>, #tpu.dimension_semantics<arbitrary>], iteration_bounds = array<i64: 1, 1>, scalar_prefetch = 0 : i64, scratch_operands = 6 : i64, tpu.core_type = #tpu.core_type<tc>, window_params = [{transform_indices = @transform_0, window_bounds = array<i64: 8, 16>}, {transform_indices = @transform_1, window_bounds = array<i64: 8, 16>}, {transform_indices = @transform_2, window_bounds = array<i64: 8, 4>}, {transform_indices = @transform_3, window_bounds = array<i64: 8, 4>}, {transform_indices = @transform_4, window_bounds = array<i64: 8, 10>}, {transform_indices = @transform_5, window_bounds = array<i64: 8, 10>}, {transform_indices = @transform_6, window_bounds = array<i64: 8, 1>}, {transform_indices = @transform_7, window_bounds = array<i64: 8, 4>}, {transform_indices = @transform_8, window_bounds = array<i64: 8, 10>}, {transform_indices = @transform_9, window_bounds = array<i64: 1, 1, 8>}]} {
    %c0_i32 = arith.constant 0 : i32
    %0 = arith.cmpi eq, %arg1, %c0_i32 : i32
    %1 = arith.extui %0 : i1 to i32
    %c0_i32_0 = arith.constant 0 : i32
    %2 = arith.cmpi ne, %1, %c0_i32_0 : i32
    scf.if %2 {
      %cst_72 = arith.constant 0.000000e+00 : f32
      %146 = vector.broadcast %cst_72 : f32 to vector<8x16xf32>
      %c0_73 = arith.constant 0 : index
      %c0_74 = arith.constant 0 : index
      %147 = vector.load %arg12[%c0_73, %c0_74] : memref<8x16xf32, #tpu.memory_space<vmem>>, vector<8x16xf32>
      tpu.vector_store %arg12[%c0_73, %c0_74], %146 {strides = array<i32>} : memref<8x16xf32, #tpu.memory_space<vmem>>, vector<8x16xf32>,
      %cst_75 = arith.constant 0.000000e+00 : f32
      %148 = vector.broadcast %cst_75 : f32 to vector<8x4xf32>
      %c0_76 = arith.constant 0 : index
      %c0_77 = arith.constant 0 : index
      %149 = vector.load %arg13[%c0_76, %c0_77] : memref<8x4xf32, #tpu.memory_space<vmem>>, vector<8x4xf32>
      tpu.vector_store %arg13[%c0_76, %c0_77], %148 {strides = array<i32>} : memref<8x4xf32, #tpu.memory_space<vmem>>, vector<8x4xf32>,
      %cst_78 = arith.constant 0.000000e+00 : f32
      %150 = vector.broadcast %cst_78 : f32 to vector<8x10xf32>
      %c0_79 = arith.constant 0 : index
      %c0_80 = arith.constant 0 : index
      %151 = vector.load %arg14[%c0_79, %c0_80] : memref<8x10xf32, #tpu.memory_space<vmem>>, vector<8x10xf32>
      tpu.vector_store %arg14[%c0_79, %c0_80], %150 {strides = array<i32>} : memref<8x10xf32, #tpu.memory_space<vmem>>, vector<8x10xf32>,
      %cst_81 = arith.constant 0.000000e+00 : f32
      %152 = vector.broadcast %cst_81 : f32 to vector<8x16xf32>
      %c0_82 = arith.constant 0 : index
      %c0_83 = arith.constant 0 : index
      %153 = vector.load %arg15[%c0_82, %c0_83] : memref<8x16xf32, #tpu.memory_space<vmem>>, vector<8x16xf32>
      tpu.vector_store %arg15[%c0_82, %c0_83], %152 {strides = array<i32>} : memref<8x16xf32, #tpu.memory_space<vmem>>, vector<8x16xf32>,
      %cst_84 = arith.constant 0.000000e+00 : f32
      %154 = vector.broadcast %cst_84 : f32 to vector<8x4xf32>
      %c0_85 = arith.constant 0 : index
      %c0_86 = arith.constant 0 : index
      %155 = vector.load %arg16[%c0_85, %c0_86] : memref<8x4xf32, #tpu.memory_space<vmem>>, vector<8x4xf32>
      tpu.vector_store %arg16[%c0_85, %c0_86], %154 {strides = array<i32>} : memref<8x4xf32, #tpu.memory_space<vmem>>, vector<8x4xf32>,
      %cst_87 = arith.constant 0.000000e+00 : f32
      %156 = vector.broadcast %cst_87 : f32 to vector<8x10xf32>
      %c0_88 = arith.constant 0 : index
      %c0_89 = arith.constant 0 : index
      %157 = vector.load %arg17[%c0_88, %c0_89] : memref<8x10xf32, #tpu.memory_space<vmem>>, vector<8x10xf32>
      tpu.vector_store %arg17[%c0_88, %c0_89], %156 {strides = array<i32>} : memref<8x10xf32, #tpu.memory_space<vmem>>, vector<8x10xf32>,
    } else {
    }
    %c1_i32 = arith.constant 1 : i32
    %3 = arith.muli %arg0, %c1_i32 : i32
    %4 = arith.addi %3, %arg1 : i32
    %5 = tpu.iota {dimensions = array<i32: 0>} : vector<8x1xi32>
    %c8_i32 = arith.constant 8 : i32
    %6 = arith.muli %4, %c8_i32 : i32
    %7 = vector.broadcast %6 : i32 to vector<8x1xi32>
    %8 = arith.addi %7, %5 : vector<8x1xi32>
    %c8_i32_1 = arith.constant 8 : i32
    %9 = vector.broadcast %c8_i32_1 : i32 to vector<8x1xi32>
    %10 = arith.cmpi slt, %8, %9 : vector<8x1xi32>
    %c0 = arith.constant 0 : index
    %c0_2 = arith.constant 0 : index
    %11 = vector.load %arg2[%c0, %c0_2] : memref<8x16xf32, #tpu.memory_space<vmem>>, vector<8x16xf32>
    %c0_3 = arith.constant 0 : index
    %c0_4 = arith.constant 0 : index
    %12 = vector.load %arg3[%c0_3, %c0_4] : memref<8x16xf32, #tpu.memory_space<vmem>>, vector<8x16xf32>
    %c0_5 = arith.constant 0 : index
    %c0_6 = arith.constant 0 : index
    %13 = vector.load %arg4[%c0_5, %c0_6] : memref<8x4xf32, #tpu.memory_space<vmem>>, vector<8x4xf32>
    %c0_7 = arith.constant 0 : index
    %c0_8 = arith.constant 0 : index
    %14 = vector.load %arg5[%c0_7, %c0_8] : memref<8x4xf32, #tpu.memory_space<vmem>>, vector<8x4xf32>
    %c0_9 = arith.constant 0 : index
    %c0_10 = arith.constant 0 : index
    %15 = vector.load %arg6[%c0_9, %c0_10] : memref<8x10xf32, #tpu.memory_space<vmem>>, vector<8x10xf32>
    %c0_11 = arith.constant 0 : index
    %c0_12 = arith.constant 0 : index
    %16 = vector.load %arg7[%c0_11, %c0_12] : memref<8x10xf32, #tpu.memory_space<vmem>>, vector<8x10xf32>
    %cst = arith.constant 2.500000e-01 : f32
    %17 = vector.broadcast %cst : f32 to vector<8x16xf32>
    %18 = arith.mulf %12, %17 : vector<8x16xf32>
    %cst_13 = arith.constant dense<0xFF800000> : vector<8xf32>
    %19 = vector.multi_reduction <maximumf>, %18, %cst_13 [1] : vector<8x16xf32> to vector<8xf32>
    %20 = vector.shape_cast %19 : vector<8xf32> to vector<8x1xf32>
    %21 = vector.broadcast %20 : vector<8x1xf32> to vector<8x16xf32>
    %22 = arith.subf %18, %21 : vector<8x16xf32>
    %23 = math.exp %22 : vector<8x16xf32>
    %cst_14 = arith.constant dense<0.000000e+00> : vector<8xf32>
    %24 = vector.multi_reduction <add>, %23, %cst_14 [1] : vector<8x16xf32> to vector<8xf32>
    %25 = vector.shape_cast %24 : vector<8xf32> to vector<8x1xf32>
    %26 = math.log %25 : vector<8x1xf32>
    %27 = vector.broadcast %26 : vector<8x1xf32> to vector<8x16xf32>
    %28 = arith.subf %22, %27 : vector<8x16xf32>
    %cst_15 = arith.constant 2.500000e-01 : f32
    %29 = vector.broadcast %cst_15 : f32 to vector<8x16xf32>
    %30 = arith.mulf %11, %29 : vector<8x16xf32>
    %cst_16 = arith.constant dense<0xFF800000> : vector<8xf32>
    %31 = vector.multi_reduction <maximumf>, %30, %cst_16 [1] : vector<8x16xf32> to vector<8xf32>
    %32 = vector.shape_cast %31 : vector<8xf32> to vector<8x1xf32>
    %33 = vector.broadcast %32 : vector<8x1xf32> to vector<8x16xf32>
    %34 = arith.subf %30, %33 : vector<8x16xf32>
    %35 = math.exp %34 : vector<8x16xf32>
    %cst_17 = arith.constant dense<0.000000e+00> : vector<8xf32>
    %36 = vector.multi_reduction <add>, %35, %cst_17 [1] : vector<8x16xf32> to vector<8xf32>
    %37 = vector.shape_cast %36 : vector<8xf32> to vector<8x1xf32>
    %38 = math.log %37 : vector<8x1xf32>
    %39 = vector.broadcast %38 : vector<8x1xf32> to vector<8x16xf32>
    %40 = arith.subf %34, %39 : vector<8x16xf32>
    %cst_18 = arith.constant 1.000000e+00 : f32
    %41 = vector.broadcast %cst_18 : f32 to vector<8x1xf32>
    %42 = arith.divf %41, %25 : vector<8x1xf32>
    %43 = arith.subf %28, %40 : vector<8x16xf32>
    %44 = arith.mulf %23, %43 : vector<8x16xf32>
    %45 = vector.broadcast %42 : vector<8x1xf32> to vector<8x16xf32>
    %46 = arith.mulf %44, %45 : vector<8x16xf32>
    %cst_19 = arith.constant 0.000000e+00 : f32
    %47 = vector.shape_cast %10 : vector<8x1xi1> to vector<8x1xi1>
    %48 = vector.broadcast %47 : vector<8x1xi1> to vector<8x16xi1>
    %49 = vector.broadcast %cst_19 : f32 to vector<8x16xf32>
    %50 = arith.select %48, %46, %49 : vector<8x16xi1>, vector<8x16xf32>
    %c0_20 = arith.constant 0 : index
    %c0_21 = arith.constant 0 : index
    %51 = vector.load %arg12[%c0_20, %c0_21] : memref<8x16xf32, #tpu.memory_space<vmem>>, vector<8x16xf32>
    %52 = vector.shape_cast %50 : vector<8x16xf32> to vector<1x8x16xf32>
    %cst_22 = arith.constant dense<0.000000e+00> : vector<8x16xf32>
    %53 = vector.multi_reduction <add>, %52, %cst_22 [0] : vector<1x8x16xf32> to vector<8x16xf32>
    %54 = arith.addf %51, %53 : vector<8x16xf32>
    %c0_23 = arith.constant 0 : index
    %c0_24 = arith.constant 0 : index
    %55 = vector.load %arg12[%c0_23, %c0_24] : memref<8x16xf32, #tpu.memory_space<vmem>>, vector<8x16xf32>
    tpu.vector_store %arg12[%c0_23, %c0_24], %54 {strides = array<i32>} : memref<8x16xf32, #tpu.memory_space<vmem>>, vector<8x16xf32>,
    %56 = arith.subf %13, %14 : vector<8x4xf32>
    %cst_25 = arith.constant 0.000000e+00 : f32
    %57 = vector.shape_cast %10 : vector<8x1xi1> to vector<8x1xi1>
    %58 = vector.broadcast %57 : vector<8x1xi1> to vector<8x4xi1>
    %59 = vector.broadcast %cst_25 : f32 to vector<8x4xf32>
    %60 = arith.select %58, %56, %59 : vector<8x4xi1>, vector<8x4xf32>
    %61 = arith.mulf %60, %60 : vector<8x4xf32>
    %c0_26 = arith.constant 0 : index
    %c0_27 = arith.constant 0 : index
    %62 = vector.load %arg13[%c0_26, %c0_27] : memref<8x4xf32, #tpu.memory_space<vmem>>, vector<8x4xf32>
    %63 = vector.shape_cast %61 : vector<8x4xf32> to vector<1x8x4xf32>
    %cst_28 = arith.constant dense<0.000000e+00> : vector<8x4xf32>
    %64 = vector.multi_reduction <add>, %63, %cst_28 [0] : vector<1x8x4xf32> to vector<8x4xf32>
    %65 = arith.addf %62, %64 : vector<8x4xf32>
    %c0_29 = arith.constant 0 : index
    %c0_30 = arith.constant 0 : index
    %66 = vector.load %arg13[%c0_29, %c0_30] : memref<8x4xf32, #tpu.memory_space<vmem>>, vector<8x4xf32>
    tpu.vector_store %arg13[%c0_29, %c0_30], %65 {strides = array<i32>} : memref<8x4xf32, #tpu.memory_space<vmem>>, vector<8x4xf32>,
    %67 = arith.subf %15, %16 : vector<8x10xf32>
    %cst_31 = arith.constant 0.000000e+00 : f32
    %68 = vector.shape_cast %10 : vector<8x1xi1> to vector<8x1xi1>
    %69 = vector.broadcast %68 : vector<8x1xi1> to vector<8x10xi1>
    %70 = vector.broadcast %cst_31 : f32 to vector<8x10xf32>
    %71 = arith.select %69, %67, %70 : vector<8x10xi1>, vector<8x10xf32>
    %72 = arith.mulf %71, %71 : vector<8x10xf32>
    %c0_32 = arith.constant 0 : index
    %c0_33 = arith.constant 0 : index
    %73 = vector.load %arg14[%c0_32, %c0_33] : memref<8x10xf32, #tpu.memory_space<vmem>>, vector<8x10xf32>
    %74 = vector.shape_cast %72 : vector<8x10xf32> to vector<1x8x10xf32>
    %cst_34 = arith.constant dense<0.000000e+00> : vector<8x10xf32>
    %75 = vector.multi_reduction <add>, %74, %cst_34 [0] : vector<1x8x10xf32> to vector<8x10xf32>
    %76 = arith.addf %73, %75 : vector<8x10xf32>
    %c0_35 = arith.constant 0 : index
    %c0_36 = arith.constant 0 : index
    %77 = vector.load %arg14[%c0_35, %c0_36] : memref<8x10xf32, #tpu.memory_space<vmem>>, vector<8x10xf32>
    tpu.vector_store %arg14[%c0_35, %c0_36], %76 {strides = array<i32>} : memref<8x10xf32, #tpu.memory_space<vmem>>, vector<8x10xf32>,
    %cst_37 = arith.constant dense<0xFF800000> : vector<8xf32>
    %78 = vector.multi_reduction <maximumf>, %11, %cst_37 [1] : vector<8x16xf32> to vector<8xf32>
    %79 = vector.shape_cast %78 : vector<8xf32> to vector<8x1xf32>
    %80 = vector.broadcast %79 : vector<8x1xf32> to vector<8x16xf32>
    %81 = arith.subf %11, %80 : vector<8x16xf32>
    %82 = math.exp %81 : vector<8x16xf32>
    %cst_38 = arith.constant dense<0.000000e+00> : vector<8xf32>
    %83 = vector.multi_reduction <add>, %82, %cst_38 [1] : vector<8x16xf32> to vector<8xf32>
    %84 = vector.shape_cast %83 : vector<8xf32> to vector<8x1xf32>
    %85 = math.log %84 : vector<8x1xf32>
    %86 = vector.broadcast %85 : vector<8x1xf32> to vector<8x16xf32>
    %87 = arith.subf %81, %86 : vector<8x16xf32>
    %88 = tpu.iota {dimensions = array<i32: 1>} : vector<8x16xi32>
    %c0_39 = arith.constant 0 : index
    %c0_40 = arith.constant 0 : index
    %89 = vector.load %arg8[%c0_39, %c0_40] : memref<8x1xi32, #tpu.memory_space<vmem>>, vector<8x1xi32>
    %90 = vector.broadcast %89 : vector<8x1xi32> to vector<8x16xi32>
    %91 = arith.cmpi eq, %88, %90 : vector<8x16xi32>
    %92 = vector.broadcast %10 : vector<8x1xi1> to vector<8x16xi1>
    %93 = arith.andi %91, %92 : vector<8x16xi1>
    %cst_41 = arith.constant 0.000000e+00 : f32
    %94 = vector.broadcast %cst_41 : f32 to vector<8x16xf32>
    %95 = arith.subf %94, %87 : vector<8x16xf32>
    %cst_42 = arith.constant 0.000000e+00 : f32
    %96 = vector.broadcast %cst_42 : f32 to vector<8x16xf32>
    %97 = arith.select %93, %95, %96 : vector<8x16xi1>, vector<8x16xf32>
    %c0_43 = arith.constant 0 : index
    %c0_44 = arith.constant 0 : index
    %98 = vector.load %arg15[%c0_43, %c0_44] : memref<8x16xf32, #tpu.memory_space<vmem>>, vector<8x16xf32>
    %99 = vector.shape_cast %97 : vector<8x16xf32> to vector<1x8x16xf32>
    %cst_45 = arith.constant dense<0.000000e+00> : vector<8x16xf32>
    %100 = vector.multi_reduction <add>, %99, %cst_45 [0] : vector<1x8x16xf32> to vector<8x16xf32>
    %101 = arith.addf %98, %100 : vector<8x16xf32>
    %c0_46 = arith.constant 0 : index
    %c0_47 = arith.constant 0 : index
    %102 = vector.load %arg15[%c0_46, %c0_47] : memref<8x16xf32, #tpu.memory_space<vmem>>, vector<8x16xf32>
    tpu.vector_store %arg15[%c0_46, %c0_47], %101 {strides = array<i32>} : memref<8x16xf32, #tpu.memory_space<vmem>>, vector<8x16xf32>,
    %c0_48 = arith.constant 0 : index
    %c0_49 = arith.constant 0 : index
    %103 = vector.load %arg9[%c0_48, %c0_49] : memref<8x4xf32, #tpu.memory_space<vmem>>, vector<8x4xf32>
    %104 = arith.subf %13, %103 : vector<8x4xf32>
    %cst_50 = arith.constant 0.000000e+00 : f32
    %105 = vector.shape_cast %10 : vector<8x1xi1> to vector<8x1xi1>
    %106 = vector.broadcast %105 : vector<8x1xi1> to vector<8x4xi1>
    %107 = vector.broadcast %cst_50 : f32 to vector<8x4xf32>
    %108 = arith.select %106, %104, %107 : vector<8x4xi1>, vector<8x4xf32>
    %109 = math.absf %108 : vector<8x4xf32>
    %cst_51 = arith.constant 1.000000e+00 : f32
    %110 = vector.broadcast %cst_51 : f32 to vector<8x4xf32>
    %111 = arith.cmpf olt, %109, %110 : vector<8x4xf32>
    %cst_52 = arith.constant 5.000000e-01 : f32
    %112 = vector.broadcast %cst_52 : f32 to vector<8x4xf32>
    %113 = arith.mulf %112, %108 : vector<8x4xf32>
    %114 = arith.mulf %113, %108 : vector<8x4xf32>
    %cst_53 = arith.constant 5.000000e-01 : f32
    %115 = vector.broadcast %cst_53 : f32 to vector<8x4xf32>
    %116 = arith.subf %109, %115 : vector<8x4xf32>
    %117 = arith.select %111, %114, %116 : vector<8x4xi1>, vector<8x4xf32>
    %c0_54 = arith.constant 0 : index
    %c0_55 = arith.constant 0 : index
    %118 = vector.load %arg16[%c0_54, %c0_55] : memref<8x4xf32, #tpu.memory_space<vmem>>, vector<8x4xf32>
    %119 = vector.shape_cast %117 : vector<8x4xf32> to vector<1x8x4xf32>
    %cst_56 = arith.constant dense<0.000000e+00> : vector<8x4xf32>
    %120 = vector.multi_reduction <add>, %119, %cst_56 [0] : vector<1x8x4xf32> to vector<8x4xf32>
    %121 = arith.addf %118, %120 : vector<8x4xf32>
    %c0_57 = arith.constant 0 : index
    %c0_58 = arith.constant 0 : index
    %122 = vector.load %arg16[%c0_57, %c0_58] : memref<8x4xf32, #tpu.memory_space<vmem>>, vector<8x4xf32>
    tpu.vector_store %arg16[%c0_57, %c0_58], %121 {strides = array<i32>} : memref<8x4xf32, #tpu.memory_space<vmem>>, vector<8x4xf32>,
    %c0_59 = arith.constant 0 : index
    %c0_60 = arith.constant 0 : index
    %123 = vector.load %arg10[%c0_59, %c0_60] : memref<8x10xf32, #tpu.memory_space<vmem>>, vector<8x10xf32>
    %124 = arith.subf %15, %123 : vector<8x10xf32>
    %cst_61 = arith.constant 0.000000e+00 : f32
    %125 = vector.shape_cast %10 : vector<8x1xi1> to vector<8x1xi1>
    %126 = vector.broadcast %125 : vector<8x1xi1> to vector<8x10xi1>
    %127 = vector.broadcast %cst_61 : f32 to vector<8x10xf32>
    %128 = arith.select %126, %124, %127 : vector<8x10xi1>, vector<8x10xf32>
    %129 = math.absf %128 : vector<8x10xf32>
    %cst_62 = arith.constant 1.000000e+00 : f32
    %130 = vector.broadcast %cst_62 : f32 to vector<8x10xf32>
    %131 = arith.cmpf olt, %129, %130 : vector<8x10xf32>
    %cst_63 = arith.constant 5.000000e-01 : f32
    %132 = vector.broadcast %cst_63 : f32 to vector<8x10xf32>
    %133 = arith.mulf %132, %128 : vector<8x10xf32>
    %134 = arith.mulf %133, %128 : vector<8x10xf32>
    %cst_64 = arith.constant 5.000000e-01 : f32
    %135 = vector.broadcast %cst_64 : f32 to vector<8x10xf32>
    %136 = arith.subf %129, %135 : vector<8x10xf32>
    %137 = arith.select %131, %134, %136 : vector<8x10xi1>, vector<8x10xf32>
    %c0_65 = arith.constant 0 : index
    %c0_66 = arith.constant 0 : index
    %138 = vector.load %arg17[%c0_65, %c0_66] : memref<8x10xf32, #tpu.memory_space<vmem>>, vector<8x10xf32>
    %139 = vector.shape_cast %137 : vector<8x10xf32> to vector<1x8x10xf32>
    %cst_67 = arith.constant dense<0.000000e+00> : vector<8x10xf32>
    %140 = vector.multi_reduction <add>, %139, %cst_67 [0] : vector<1x8x10xf32> to vector<8x10xf32>
    %141 = arith.addf %138, %140 : vector<8x10xf32>
    %c0_68 = arith.constant 0 : index
    %c0_69 = arith.constant 0 : index
    %142 = vector.load %arg17[%c0_68, %c0_69] : memref<8x10xf32, #tpu.memory_space<vmem>>, vector<8x10xf32>
    tpu.vector_store %arg17[%c0_68, %c0_69], %141 {strides = array<i32>} : memref<8x10xf32, #tpu.memory_space<vmem>>, vector<8x10xf32>,
    %c0_i32_70 = arith.constant 0 : i32
    %143 = arith.cmpi eq, %arg1, %c0_i32_70 : i32
    %144 = arith.extui %143 : i1 to i32
    %c0_i32_71 = arith.constant 0 : i32
    %145 = arith.cmpi ne, %144, %c0_i32_71 : i32
    scf.if %145 {
      %c0_72 = arith.constant 0 : index
      %c0_73 = arith.constant 0 : index
      %146 = vector.load %arg12[%c0_72, %c0_73] : memref<8x16xf32, #tpu.memory_space<vmem>>, vector<8x16xf32>
      %147 = vector.shape_cast %146 : vector<8x16xf32> to vector<1x8x16xf32>
      %cst_74 = arith.constant dense<0.000000e+00> : vector<1xf32>
      %148 = vector.multi_reduction <add>, %147, %cst_74 [1, 2] : vector<1x8x16xf32> to vector<1xf32>
      %149 = vector.shape_cast %148 : vector<1xf32> to vector<1x1x1xf32>
      %150 = vector.extract %149[0, 0, 0] : f32 from vector<1x1x1xf32>
      %c0_75 = arith.constant 0 : index
      %c0_76 = arith.constant 0 : index
      %151 = vector.load %arg13[%c0_75, %c0_76] : memref<8x4xf32, #tpu.memory_space<vmem>>, vector<8x4xf32>
      %152 = vector.shape_cast %151 : vector<8x4xf32> to vector<1x8x4xf32>
      %cst_77 = arith.constant dense<0.000000e+00> : vector<1xf32>
      %153 = vector.multi_reduction <add>, %152, %cst_77 [1, 2] : vector<1x8x4xf32> to vector<1xf32>
      %154 = vector.shape_cast %153 : vector<1xf32> to vector<1x1x1xf32>
      %155 = vector.extract %154[0, 0, 0] : f32 from vector<1x1x1xf32>
      %c0_78 = arith.constant 0 : index
      %c0_79 = arith.constant 0 : index
      %156 = vector.load %arg14[%c0_78, %c0_79] : memref<8x10xf32, #tpu.memory_space<vmem>>, vector<8x10xf32>
      %157 = vector.shape_cast %156 : vector<8x10xf32> to vector<1x8x10xf32>
      %cst_80 = arith.constant dense<0.000000e+00> : vector<1xf32>
      %158 = vector.multi_reduction <add>, %157, %cst_80 [1, 2] : vector<1x8x10xf32> to vector<1xf32>
      %159 = vector.shape_cast %158 : vector<1xf32> to vector<1x1x1xf32>
      %160 = vector.extract %159[0, 0, 0] : f32 from vector<1x1x1xf32>
      %c0_81 = arith.constant 0 : index
      %c0_82 = arith.constant 0 : index
      %161 = vector.load %arg15[%c0_81, %c0_82] : memref<8x16xf32, #tpu.memory_space<vmem>>, vector<8x16xf32>
      %162 = vector.shape_cast %161 : vector<8x16xf32> to vector<1x8x16xf32>
      %cst_83 = arith.constant dense<0.000000e+00> : vector<1xf32>
      %163 = vector.multi_reduction <add>, %162, %cst_83 [1, 2] : vector<1x8x16xf32> to vector<1xf32>
      %164 = vector.shape_cast %163 : vector<1xf32> to vector<1x1x1xf32>
      %165 = vector.extract %164[0, 0, 0] : f32 from vector<1x1x1xf32>
      %c0_84 = arith.constant 0 : index
      %c0_85 = arith.constant 0 : index
      %166 = vector.load %arg16[%c0_84, %c0_85] : memref<8x4xf32, #tpu.memory_space<vmem>>, vector<8x4xf32>
      %167 = vector.shape_cast %166 : vector<8x4xf32> to vector<1x8x4xf32>
      %cst_86 = arith.constant dense<0.000000e+00> : vector<1xf32>
      %168 = vector.multi_reduction <add>, %167, %cst_86 [1, 2] : vector<1x8x4xf32> to vector<1xf32>
      %169 = vector.shape_cast %168 : vector<1xf32> to vector<1x1x1xf32>
      %170 = vector.extract %169[0, 0, 0] : f32 from vector<1x1x1xf32>
      %c0_87 = arith.constant 0 : index
      %c0_88 = arith.constant 0 : index
      %171 = vector.load %arg17[%c0_87, %c0_88] : memref<8x10xf32, #tpu.memory_space<vmem>>, vector<8x10xf32>
      %172 = vector.shape_cast %171 : vector<8x10xf32> to vector<1x8x10xf32>
      %cst_89 = arith.constant dense<0.000000e+00> : vector<1xf32>
      %173 = vector.multi_reduction <add>, %172, %cst_89 [1, 2] : vector<1x8x10xf32> to vector<1xf32>
      %174 = vector.shape_cast %173 : vector<1xf32> to vector<1x1x1xf32>
      %175 = vector.extract %174[0, 0, 0] : f32 from vector<1x1x1xf32>
      %176 = tpu.iota {dimensions = array<i32: 2>} : vector<1x1x8xi32>
      %cst_90 = arith.constant 0.000000e+00 : f32
      %177 = vector.broadcast %cst_90 : f32 to vector<1x1x8xf32>
      %c0_i32_91 = arith.constant 0 : i32
      %178 = vector.broadcast %c0_i32_91 : i32 to vector<1x1x8xi32>
      %179 = arith.cmpi eq, %176, %178 : vector<1x1x8xi32>
      %cst_92 = arith.constant 0.000000e+00 : f32
      %180 = vector.broadcast %150 : f32 to vector<1x1x8xf32>
      %181 = vector.broadcast %cst_92 : f32 to vector<1x1x8xf32>
      %182 = arith.select %179, %180, %181 : vector<1x1x8xi1>, vector<1x1x8xf32>
      %183 = arith.addf %177, %182 : vector<1x1x8xf32>
      %c1_i32_93 = arith.constant 1 : i32
      %184 = vector.broadcast %c1_i32_93 : i32 to vector<1x1x8xi32>
      %185 = arith.cmpi eq, %176, %184 : vector<1x1x8xi32>
      %cst_94 = arith.constant 0.000000e+00 : f32
      %186 = vector.broadcast %155 : f32 to vector<1x1x8xf32>
      %187 = vector.broadcast %cst_94 : f32 to vector<1x1x8xf32>
      %188 = arith.select %185, %186, %187 : vector<1x1x8xi1>, vector<1x1x8xf32>
      %189 = arith.addf %183, %188 : vector<1x1x8xf32>
      %c2_i32 = arith.constant 2 : i32
      %190 = vector.broadcast %c2_i32 : i32 to vector<1x1x8xi32>
      %191 = arith.cmpi eq, %176, %190 : vector<1x1x8xi32>
      %cst_95 = arith.constant 0.000000e+00 : f32
      %192 = vector.broadcast %160 : f32 to vector<1x1x8xf32>
      %193 = vector.broadcast %cst_95 : f32 to vector<1x1x8xf32>
      %194 = arith.select %191, %192, %193 : vector<1x1x8xi1>, vector<1x1x8xf32>
      %195 = arith.addf %189, %194 : vector<1x1x8xf32>
      %c3_i32 = arith.constant 3 : i32
      %196 = vector.broadcast %c3_i32 : i32 to vector<1x1x8xi32>
      %197 = arith.cmpi eq, %176, %196 : vector<1x1x8xi32>
      %cst_96 = arith.constant 0.000000e+00 : f32
      %198 = vector.broadcast %165 : f32 to vector<1x1x8xf32>
      %199 = vector.broadcast %cst_96 : f32 to vector<1x1x8xf32>
      %200 = arith.select %197, %198, %199 : vector<1x1x8xi1>, vector<1x1x8xf32>
      %201 = arith.addf %195, %200 : vector<1x1x8xf32>
      %c4_i32 = arith.constant 4 : i32
      %202 = vector.broadcast %c4_i32 : i32 to vector<1x1x8xi32>
      %203 = arith.cmpi eq, %176, %202 : vector<1x1x8xi32>
      %cst_97 = arith.constant 0.000000e+00 : f32
      %204 = vector.broadcast %170 : f32 to vector<1x1x8xf32>
      %205 = vector.broadcast %cst_97 : f32 to vector<1x1x8xf32>
      %206 = arith.select %203, %204, %205 : vector<1x1x8xi1>, vector<1x1x8xf32>
      %207 = arith.addf %201, %206 : vector<1x1x8xf32>
      %c5_i32 = arith.constant 5 : i32
      %208 = vector.broadcast %c5_i32 : i32 to vector<1x1x8xi32>
      %209 = arith.cmpi eq, %176, %208 : vector<1x1x8xi32>
      %cst_98 = arith.constant 0.000000e+00 : f32
      %210 = vector.broadcast %175 : f32 to vector<1x1x8xf32>
      %211 = vector.broadcast %cst_98 : f32 to vector<1x1x8xf32>
      %212 = arith.select %209, %210, %211 : vector<1x1x8xi1>, vector<1x1x8xf32>
      %213 = arith.addf %207, %212 : vector<1x1x8xf32>
      %c0_99 = arith.constant 0 : index
      %c0_100 = arith.constant 0 : index
      %c0_101 = arith.constant 0 : index
      %214 = vector.load %arg11[%c0_99, %c0_100, %c0_101] : memref<1x1x8xf32, #tpu.memory_space<vmem>>, vector<1x1x8xf32>
      tpu.vector_store %arg11[%c0_99, %c0_100, %c0_101], %213 {strides = array<i32>} : memref<1x1x8xf32, #tpu.memory_space<vmem>>, vector<1x1x8xf32>,
    } else {
    }
    return
  }
  func.func @transform_0(%arg0: i32, %arg1: i32) -> (i32, i32) {
    %c1_i32 = arith.constant 1 : i32
    %0 = arith.muli %arg0, %c1_i32 : i32
    %1 = arith.addi %0, %arg1 : i32
    %c0_i32 = arith.constant 0 : i32
    %2 = arith.minsi %1, %c0_i32 : i32
    %c0_i32_0 = arith.constant 0 : i32
    %c0_i32_1 = arith.constant 0 : i32
    return %2, %c0_i32_0 : i32, i32
  }
  func.func @transform_1(%arg0: i32, %arg1: i32) -> (i32, i32) {
    %c1_i32 = arith.constant 1 : i32
    %0 = arith.muli %arg0, %c1_i32 : i32
    %1 = arith.addi %0, %arg1 : i32
    %c0_i32 = arith.constant 0 : i32
    %2 = arith.minsi %1, %c0_i32 : i32
    %c0_i32_0 = arith.constant 0 : i32
    %c0_i32_1 = arith.constant 0 : i32
    return %2, %c0_i32_0 : i32, i32
  }
  func.func @transform_2(%arg0: i32, %arg1: i32) -> (i32, i32) {
    %c1_i32 = arith.constant 1 : i32
    %0 = arith.muli %arg0, %c1_i32 : i32
    %1 = arith.addi %0, %arg1 : i32
    %c0_i32 = arith.constant 0 : i32
    %2 = arith.minsi %1, %c0_i32 : i32
    %c0_i32_0 = arith.constant 0 : i32
    %c0_i32_1 = arith.constant 0 : i32
    return %2, %c0_i32_0 : i32, i32
  }
  func.func @transform_3(%arg0: i32, %arg1: i32) -> (i32, i32) {
    %c1_i32 = arith.constant 1 : i32
    %0 = arith.muli %arg0, %c1_i32 : i32
    %1 = arith.addi %0, %arg1 : i32
    %c0_i32 = arith.constant 0 : i32
    %2 = arith.minsi %1, %c0_i32 : i32
    %c0_i32_0 = arith.constant 0 : i32
    %c0_i32_1 = arith.constant 0 : i32
    return %2, %c0_i32_0 : i32, i32
  }
  func.func @transform_4(%arg0: i32, %arg1: i32) -> (i32, i32) {
    %c1_i32 = arith.constant 1 : i32
    %0 = arith.muli %arg0, %c1_i32 : i32
    %1 = arith.addi %0, %arg1 : i32
    %c0_i32 = arith.constant 0 : i32
    %2 = arith.minsi %1, %c0_i32 : i32
    %c0_i32_0 = arith.constant 0 : i32
    %c0_i32_1 = arith.constant 0 : i32
    return %2, %c0_i32_0 : i32, i32
  }
  func.func @transform_5(%arg0: i32, %arg1: i32) -> (i32, i32) {
    %c1_i32 = arith.constant 1 : i32
    %0 = arith.muli %arg0, %c1_i32 : i32
    %1 = arith.addi %0, %arg1 : i32
    %c0_i32 = arith.constant 0 : i32
    %2 = arith.minsi %1, %c0_i32 : i32
    %c0_i32_0 = arith.constant 0 : i32
    %c0_i32_1 = arith.constant 0 : i32
    return %2, %c0_i32_0 : i32, i32
  }
  func.func @transform_6(%arg0: i32, %arg1: i32) -> (i32, i32) {
    %c1_i32 = arith.constant 1 : i32
    %0 = arith.muli %arg0, %c1_i32 : i32
    %1 = arith.addi %0, %arg1 : i32
    %c0_i32 = arith.constant 0 : i32
    %2 = arith.minsi %1, %c0_i32 : i32
    %c0_i32_0 = arith.constant 0 : i32
    %c0_i32_1 = arith.constant 0 : i32
    return %2, %c0_i32_0 : i32, i32
  }
  func.func @transform_7(%arg0: i32, %arg1: i32) -> (i32, i32) {
    %c1_i32 = arith.constant 1 : i32
    %0 = arith.muli %arg0, %c1_i32 : i32
    %1 = arith.addi %0, %arg1 : i32
    %c0_i32 = arith.constant 0 : i32
    %2 = arith.minsi %1, %c0_i32 : i32
    %c0_i32_0 = arith.constant 0 : i32
    %c0_i32_1 = arith.constant 0 : i32
    return %2, %c0_i32_0 : i32, i32
  }
  func.func @transform_8(%arg0: i32, %arg1: i32) -> (i32, i32) {
    %c1_i32 = arith.constant 1 : i32
    %0 = arith.muli %arg0, %c1_i32 : i32
    %1 = arith.addi %0, %arg1 : i32
    %c0_i32 = arith.constant 0 : i32
    %2 = arith.minsi %1, %c0_i32 : i32
    %c0_i32_0 = arith.constant 0 : i32
    %c0_i32_1 = arith.constant 0 : i32
    return %2, %c0_i32_0 : i32, i32
  }
  func.func @transform_9(%arg0: i32, %arg1: i32) -> (i32, i32, i32) {
    %c0_i32 = arith.constant 0 : i32
    %c0_i32_0 = arith.constant 0 : i32
    %c0_i32_1 = arith.constant 0 : i32
    return %arg0, %c0_i32, %c0_i32_0 : i32, i32, i32
  }
}

</mosaic_0001>

<llo_original>
// kernel: tpu_custom_call.1
$region0: #{tpu_custom_call.1}
  #allocation0 [shape = 'u32[]', space=smem, size = 0x4, offset = 0x4, fixed_abs, tag = 'smem constant byte address 0x4 - core index']
  #allocation1 [shape = 'u32[72,128]{1,0:T(1,128)}', space=vmem, size = 0x9000, scoped, tag = 'internal scratch']
  #allocation2 [shape = 'f32[8,16]{1,0:T(8,128)}', space=vmem, size = 0x1000, scoped, tag = 'scratch operand']
  #allocation3 [shape = 'f32[8,4]{1,0:T(8,128)}', space=vmem, size = 0x1000, scoped, tag = 'scratch operand']
  #allocation4 [shape = 'f32[8,10]{1,0:T(8,128)}', space=vmem, size = 0x1000, scoped, tag = 'scratch operand']
  #allocation5 [shape = 'f32[8,16]{1,0:T(8,128)}', space=vmem, size = 0x1000, scoped, tag = 'scratch operand']
  #allocation6 [shape = 'f32[8,4]{1,0:T(8,128)}', space=vmem, size = 0x1000, scoped, tag = 'scratch operand']
  #allocation7 [shape = 'f32[8,10]{1,0:T(8,128)}', space=vmem, size = 0x1000, scoped, tag = 'scratch operand']
  %s0 = inlined_call_operand.vmem [shape: f32[8,16], index: 0, kind: input, shape index: {}]
  %s1 = inlined_call_operand.vmem [shape: f32[8,16], index: 1, kind: input, shape index: {}]
  %s2 = inlined_call_operand.vmem [shape: f32[8,4], index: 2, kind: input, shape index: {}]
  %s3 = inlined_call_operand.vmem [shape: f32[8,4], index: 3, kind: input, shape index: {}]
  %s4 = inlined_call_operand.vmem [shape: f32[8,10], index: 4, kind: input, shape index: {}]
  %s5 = inlined_call_operand.vmem [shape: f32[8,10], index: 5, kind: input, shape index: {}]
  %s6 = inlined_call_operand.vmem [shape: s32[8,1], index: 6, kind: input, shape index: {}]
  %s7 = inlined_call_operand.vmem [shape: f32[8,4], index: 7, kind: input, shape index: {}]
  %s8 = inlined_call_operand.vmem [shape: f32[8,10], index: 8, kind: input, shape index: {}]
  %s9 = inlined_call_operand.hbm [shape: f32[1,1,8], index: 9, kind: output, shape index: {}]
  %s10 = sld [smem:[#allocation0]]
  $region54: #{tpu_custom_call.1} parent=0
    _
  %s12 = ssub.s32 1, %s10
  %s13 = scalar_select 0, %s12, %s10
  $region1: #{tpu_custom_call.1} parent=0
    #allocation8 [shape = 'u8[512]{0}', space=vmem, size = 0x400, scoped, tag = 'output window, operand 0, single buffered']
    #allocation9 [shape = 's32[1]{0}', space=sflag, size = 0x4, scoped, tag = 'scoped memory for tpu_custom_call.1']
    %14 = vsyncpa [#allocation9], 0
    // Predicated region
    $region2: #{tpu_custom_call.1} parent=1 // pred_check
      _
    $region3: #{tpu_custom_call.1} parent=1 // pred_check_branch
      %16 = sbr.rel (0) target = $region5
    $region4: #{tpu_custom_call.1} parent=1 // pred_region
      %s17 = sadd.s32 0, 0
      %p18 = scmp.lt.s32.totalorder %s17, 0
      %s19 = scalar_select %p18, %s17, 0
      %p20 = scmp.lt.s32.totalorder %s19, 0
      %s21 = scalar_select %p20, %s19, 0
      %s22 = smul.addr %s21, 8
      %s23 = scalar_lea.vmem %s0, %s22
      %s24 = sadd.s32 0, 0
      %p25 = scmp.lt.s32.totalorder %s24, 0
      %s26 = scalar_select %p25, %s24, 0
    $region5: #{tpu_custom_call.1} parent=1 // pred_fallthru
      _
    // Predicated region
    $region6: #{tpu_custom_call.1} parent=1 // pred_check
      _
    $region7: #{tpu_custom_call.1} parent=1 // pred_check_branch
      %28 = sbr.rel (0) target = $region9
    $region8: #{tpu_custom_call.1} parent=1 // pred_region
      %s29 = sadd.s32 0, 0
      %p30 = scmp.lt.s32.totalorder %s29, 0
      %s31 = scalar_select %p30, %s29, 0
      %p32 = scmp.lt.s32.totalorder %s31, 0
      %s33 = scalar_select %p32, %s31, 0
      %s34 = smul.addr %s33, 8
      %s35 = scalar_lea.vmem %s1, %s34
      %s36 = sadd.s32 0, 0
      %p37 = scmp.lt.s32.totalorder %s36, 0
      %s38 = scalar_select %p37, %s36, 0
    $region9: #{tpu_custom_call.1} parent=1 // pred_fallthru
      _
    // Predicated region
    $region10: #{tpu_custom_call.1} parent=1 // pred_check
      _
    $region11: #{tpu_custom_call.1} parent=1 // pred_check_branch
      %40 = sbr.rel (0) target = $region13
    $region12: #{tpu_custom_call.1} parent=1 // pred_region
      %s41 = sadd.s32 0, 0
      %p42 = scmp.lt.s32.totalorder %s41, 0
      %s43 = scalar_select %p42, %s41, 0
      %p44 = scmp.lt.s32.totalorder %s43, 0
      %s45 = scalar_select %p44, %s43, 0
      %s46 = smul.addr %s45, 8
      %s47 = scalar_lea.vmem %s2, %s46
      %s48 = sadd.s32 0, 0
      %p49 = scmp.lt.s32.totalorder %s48, 0
      %s50 = scalar_select %p49, %s48, 0
    $region13: #{tpu_custom_call.1} parent=1 // pred_fallthru
      _
    // Predicated region
    $region14: #{tpu_custom_call.1} parent=1 // pred_check
      _
    $region15: #{tpu_custom_call.1} parent=1 // pred_check_branch
      %52 = sbr.rel (0) target = $region17
    $region16: #{tpu_custom_call.1} parent=1 // pred_region
      %s53 = sadd.s32 0, 0
      %p54 = scmp.lt.s32.totalorder %s53, 0
      %s55 = scalar_select %p54, %s53, 0
      %p56 = scmp.lt.s32.totalorder %s55, 0
      %s57 = scalar_select %p56, %s55, 0
      %s58 = smul.addr %s57, 8
      %s59 = scalar_lea.vmem %s3, %s58
      %s60 = sadd.s32 0, 0
      %p61 = scmp.lt.s32.totalorder %s60, 0
      %s62 = scalar_select %p61, %s60, 0
    $region17: #{tpu_custom_call.1} parent=1 // pred_fallthru
      _
    // Predicated region
    $region18: #{tpu_custom_call.1} parent=1 // pred_check
      _
    $region19: #{tpu_custom_call.1} parent=1 // pred_check_branch
      %64 = sbr.rel (0) target = $region21
    $region20: #{tpu_custom_call.1} parent=1 // pred_region
      %s65 = sadd.s32 0, 0
      %p66 = scmp.lt.s32.totalorder %s65, 0
      %s67 = scalar_select %p66, %s65, 0
      %p68 = scmp.lt.s32.totalorder %s67, 0
      %s69 = scalar_select %p68, %s67, 0
      %s70 = smul.addr %s69, 8
      %s71 = scalar_lea.vmem %s4, %s70
      %s72 = sadd.s32 0, 0
      %p73 = scmp.lt.s32.totalorder %s72, 0
      %s74 = scalar_select %p73, %s72, 0
    $region21: #{tpu_custom_call.1} parent=1 // pred_fallthru
      _
    // Predicated region
    $region22: #{tpu_custom_call.1} parent=1 // pred_check
      _
    $region23: #{tpu_custom_call.1} parent=1 // pred_check_branch
      %76 = sbr.rel (0) target = $region25
    $region24: #{tpu_custom_call.1} parent=1 // pred_region
      %s77 = sadd.s32 0, 0
      %p78 = scmp.lt.s32.totalorder %s77, 0
      %s79 = scalar_select %p78, %s77, 0
      %p80 = scmp.lt.s32.totalorder %s79, 0
      %s81 = scalar_select %p80, %s79, 0
      %s82 = smul.addr %s81, 8
      %s83 = scalar_lea.vmem %s5, %s82
      %s84 = sadd.s32 0, 0
      %p85 = scmp.lt.s32.totalorder %s84, 0
      %s86 = scalar_select %p85, %s84, 0
    $region25: #{tpu_custom_call.1} parent=1 // pred_fallthru
      _
    // Predicated region
    $region26: #{tpu_custom_call.1} parent=1 // pred_check
      _
    $region27: #{tpu_custom_call.1} parent=1 // pred_check_branch
      %88 = sbr.rel (0) target = $region29
    $region28: #{tpu_custom_call.1} parent=1 // pred_region
      %s89 = sadd.s32 0, 0
      %p90 = scmp.lt.s32.totalorder %s89, 0
      %s91 = scalar_select %p90, %s89, 0
      %p92 = scmp.lt.s32.totalorder %s91, 0
      %s93 = scalar_select %p92, %s91, 0
      %s94 = smul.addr %s93, 8
      %s95 = scalar_lea.vmem %s6, %s94
      %s96 = sadd.s32 0, 0
      %p97 = scmp.lt.s32.totalorder %s96, 0
      %s98 = scalar_select %p97, %s96, 0
    $region29: #{tpu_custom_call.1} parent=1 // pred_fallthru
      _
    // Predicated region
    $region30: #{tpu_custom_call.1} parent=1 // pred_check
      _
    $region31: #{tpu_custom_call.1} parent=1 // pred_check_branch
      %100 = sbr.rel (0) target = $region33
    $region32: #{tpu_custom_call.1} parent=1 // pred_region
      %s101 = sadd.s32 0, 0
      %p102 = scmp.lt.s32.totalorder %s101, 0
      %s103 = scalar_select %p102, %s101, 0
      %p104 = scmp.lt.s32.totalorder %s103, 0
      %s105 = scalar_select %p104, %s103, 0
      %s106 = smul.addr %s105, 8
      %s107 = scalar_lea.vmem %s7, %s106
      %s108 = sadd.s32 0, 0
      %p109 = scmp.lt.s32.totalorder %s108, 0
      %s110 = scalar_select %p109, %s108, 0
    $region33: #{tpu_custom_call.1} parent=1 // pred_fallthru
      _
    // Predicated region
    $region34: #{tpu_custom_call.1} parent=1 // pred_check
      _
    $region35: #{tpu_custom_call.1} parent=1 // pred_check_branch
      %112 = sbr.rel (0) target = $region37
    $region36: #{tpu_custom_call.1} parent=1 // pred_region
      %s113 = sadd.s32 0, 0
      %p114 = scmp.lt.s32.totalorder %s113, 0
      %s115 = scalar_select %p114, %s113, 0
      %p116 = scmp.lt.s32.totalorder %s115, 0
      %s117 = scalar_select %p116, %s115, 0
      %s118 = smul.addr %s117, 8
      %s119 = scalar_lea.vmem %s8, %s118
      %s120 = sadd.s32 0, 0
      %p121 = scmp.lt.s32.totalorder %s120, 0
      %s122 = scalar_select %p121, %s120, 0
    $region37: #{tpu_custom_call.1} parent=1 // pred_fallthru
      _
    %s123 = sadd.s32 0, 0
    %p124 = scmp.lt.s32.totalorder %s123, 0
    %s125 = scalar_select %p124, %s123, 0
    %p126 = scmp.lt.s32.totalorder %s125, 0
    %s127 = scalar_select %p126, %s125, 0
    %s128 = smul.addr %s127, 8
    %s129 = scalar_lea.vmem %s0, %s128
    %s130 = sadd.s32 0, 0
    %p131 = scmp.lt.s32.totalorder %s130, 0
    %s132 = scalar_select %p131, %s130, 0
    %p133 = scmp.lt.s32.totalorder %s132, 0
    %s134 = scalar_select %p133, %s132, 0
    %s135 = smul.addr %s134, 8
    %s136 = scalar_lea.vmem %s1, %s135
    %s137 = sadd.s32 0, 0
    %p138 = scmp.lt.s32.totalorder %s137, 0
    %s139 = scalar_select %p138, %s137, 0
    %p140 = scmp.lt.s32.totalorder %s139, 0
    %s141 = scalar_select %p140, %s139, 0
    %s142 = smul.addr %s141, 8
    %s143 = scalar_lea.vmem %s2, %s142
    %s144 = sadd.s32 0, 0
    %p145 = scmp.lt.s32.totalorder %s144, 0
    %s146 = scalar_select %p145, %s144, 0
    %p147 = scmp.lt.s32.totalorder %s146, 0
    %s148 = scalar_select %p147, %s146, 0
    %s149 = smul.addr %s148, 8
    %s150 = scalar_lea.vmem %s3, %s149
    %s151 = sadd.s32 0, 0
    %p152 = scmp.lt.s32.totalorder %s151, 0
    %s153 = scalar_select %p152, %s151, 0
    %p154 = scmp.lt.s32.totalorder %s153, 0
    %s155 = scalar_select %p154, %s153, 0
    %s156 = smul.addr %s155, 8
    %s157 = scalar_lea.vmem %s4, %s156
    %s158 = sadd.s32 0, 0
    %p159 = scmp.lt.s32.totalorder %s158, 0
    %s160 = scalar_select %p159, %s158, 0
    %p161 = scmp.lt.s32.totalorder %s160, 0
    %s162 = scalar_select %p161, %s160, 0
    %s163 = smul.addr %s162, 8
    %s164 = scalar_lea.vmem %s5, %s163
    %s165 = sadd.s32 0, 0
    %p166 = scmp.lt.s32.totalorder %s165, 0
    %s167 = scalar_select %p166, %s165, 0
    %p168 = scmp.lt.s32.totalorder %s167, 0
    %s169 = scalar_select %p168, %s167, 0
    %s170 = smul.addr %s169, 8
    %s171 = scalar_lea.vmem %s6, %s170
    %s172 = sadd.s32 0, 0
    %p173 = scmp.lt.s32.totalorder %s172, 0
    %s174 = scalar_select %p173, %s172, 0
    %p175 = scmp.lt.s32.totalorder %s174, 0
    %s176 = scalar_select %p175, %s174, 0
    %s177 = smul.addr %s176, 8
    %s178 = scalar_lea.vmem %s7, %s177
    %s179 = sadd.s32 0, 0
    %p180 = scmp.lt.s32.totalorder %s179, 0
    %s181 = scalar_select %p180, %s179, 0
    %p182 = scmp.lt.s32.totalorder %s181, 0
    %s183 = scalar_select %p182, %s181, 0
    %s184 = smul.addr %s183, 8
    %s185 = scalar_lea.vmem %s8, %s184
    %s186 = sadd.s32 0, 0
    %p187 = scmp.lt.s32.totalorder %s186, 0
    %s188 = scalar_select %p187, %s186, 0
    %p189 = scmp.lt.s32.totalorder %s188, 0
    %s190 = scalar_select %p189, %s188, 0
    %s191 = smul.addr %s190, 8
    %s192 = scalar_lea.vmem %s0, %s191
    %s193 = sadd.s32 0, 0
    %p194 = scmp.lt.s32.totalorder %s193, 0
    %s195 = scalar_select %p194, %s193, 0
    %s196 = sadd.s32 0, 0
    %p197 = scmp.lt.s32.totalorder %s196, 0
    %s198 = scalar_select %p197, %s196, 0
    %p199 = scmp.lt.s32.totalorder %s198, 0
    %s200 = scalar_select %p199, %s198, 0
    %s201 = smul.addr %s200, 8
    %s202 = scalar_lea.vmem %s1, %s201
    %s203 = sadd.s32 0, 0
    %p204 = scmp.lt.s32.totalorder %s203, 0
    %s205 = scalar_select %p204, %s203, 0
    %s206 = sadd.s32 0, 0
    %p207 = scmp.lt.s32.totalorder %s206, 0
    %s208 = scalar_select %p207, %s206, 0
    %p209 = scmp.lt.s32.totalorder %s208, 0
    %s210 = scalar_select %p209, %s208, 0
    %s211 = smul.addr %s210, 8
    %s212 = scalar_lea.vmem %s2, %s211
    %s213 = sadd.s32 0, 0
    %p214 = scmp.lt.s32.totalorder %s213, 0
    %s215 = scalar_select %p214, %s213, 0
    %s216 = sadd.s32 0, 0
    %p217 = scmp.lt.s32.totalorder %s216, 0
    %s218 = scalar_select %p217, %s216, 0
    %p219 = scmp.lt.s32.totalorder %s218, 0
    %s220 = scalar_select %p219, %s218, 0
    %s221 = smul.addr %s220, 8
    %s222 = scalar_lea.vmem %s3, %s221
    %s223 = sadd.s32 0, 0
    %p224 = scmp.lt.s32.totalorder %s223, 0
    %s225 = scalar_select %p224, %s223, 0
    %s226 = sadd.s32 0, 0
    %p227 = scmp.lt.s32.totalorder %s226, 0
    %s228 = scalar_select %p227, %s226, 0
    %p229 = scmp.lt.s32.totalorder %s228, 0
    %s230 = scalar_select %p229, %s228, 0
    %s231 = smul.addr %s230, 8
    %s232 = scalar_lea.vmem %s4, %s231
    %s233 = sadd.s32 0, 0
    %p234 = scmp.lt.s32.totalorder %s233, 0
    %s235 = scalar_select %p234, %s233, 0
    %s236 = sadd.s32 0, 0
    %p237 = scmp.lt.s32.totalorder %s236, 0
    %s238 = scalar_select %p237, %s236, 0
    %p239 = scmp.lt.s32.totalorder %s238, 0
    %s240 = scalar_select %p239, %s238, 0
    %s241 = smul.addr %s240, 8
    %s242 = scalar_lea.vmem %s5, %s241
    %s243 = sadd.s32 0, 0
    %p244 = scmp.lt.s32.totalorder %s243, 0
    %s245 = scalar_select %p244, %s243, 0
    %s246 = sadd.s32 0, 0
    %p247 = scmp.lt.s32.totalorder %s246, 0
    %s248 = scalar_select %p247, %s246, 0
    %p249 = scmp.lt.s32.totalorder %s248, 0
    %s250 = scalar_select %p249, %s248, 0
    %s251 = smul.addr %s250, 8
    %s252 = scalar_lea.vmem %s6, %s251
    %s253 = sadd.s32 0, 0
    %p254 = scmp.lt.s32.totalorder %s253, 0
    %s255 = scalar_select %p254, %s253, 0
    %s256 = sadd.s32 0, 0
    %p257 = scmp.lt.s32.totalorder %s256, 0
    %s258 = scalar_select %p257, %s256, 0
    %p259 = scmp.lt.s32.totalorder %s258, 0
    %s260 = scalar_select %p259, %s258, 0
    %s261 = smul.addr %s260, 8
    %s262 = scalar_lea.vmem %s7, %s261
    %s263 = sadd.s32 0, 0
    %p264 = scmp.lt.s32.totalorder %s263, 0
    %s265 = scalar_select %p264, %s263, 0
    %s266 = sadd.s32 0, 0
    %p267 = scmp.lt.s32.totalorder %s266, 0
    %s268 = scalar_select %p267, %s266, 0
    %p269 = scmp.lt.s32.totalorder %s268, 0
    %s270 = scalar_select %p269, %s268, 0
    %s271 = smul.addr %s270, 8
    %s272 = scalar_lea.vmem %s8, %s271
    %s273 = sadd.s32 0, 0
    %p274 = scmp.lt.s32.totalorder %s273, 0
    %s275 = scalar_select %p274, %s273, 0
    %p276 = scmp.eq.s32.totalorder 0, 0
    // Predicated region
    $region38: #{tpu_custom_call.1} parent=1 // pred_check
      %p277 = pneg %p276
    $region39: #{tpu_custom_call.1} parent=1 // pred_check_branch
      %279 = sbr.rel (%p277) target = $region41
    $region40: #{tpu_custom_call.1} parent=1 // pred_region
      %vm280 = vcmask 130048
      %281 = vst.msk [vmem:[#allocation2] sm:$0xff] %vm280, 0.0
      %vm282 = vcmask 31744
      %283 = vst.msk [vmem:[#allocation3] sm:$0xff] %vm282, 0.0
      %vm284 = vcmask 80896
      %285 = vst.msk [vmem:[#allocation4] sm:$0xff] %vm284, 0.0
      %286 = vst.msk [vmem:[#allocation5] sm:$0xff] %vm280, 0.0
      %287 = vst.msk [vmem:[#allocation6] sm:$0xff] %vm282, 0.0
      %288 = vst.msk [vmem:[#allocation7] sm:$0xff] %vm284, 0.0
    $region41: #{tpu_custom_call.1} parent=1 // pred_fallthru
      _
    %s289 = sadd.s32 0, 0
    %v290 = vlaneseq
    %v291 = vshrl.u32 %v290, 7
    %s292 = smul.u32 %s289, 8
    %v293 = vstv %s292
    %v294 = vadd.s32 %v293, %v291
    %vm295 = vcmp.lt.s32.totalorder %v294, 8
    %v296 = vld [vmem:[%s192] sm:$0xff]
    %v297 = vld [vmem:[%s202] sm:$0xff]
    %v298 = vld [vmem:[%s212] sm:$0xff]
    %v299 = vld [vmem:[%s222] sm:$0xff]
    %v300 = vld [vmem:[%s232] sm:$0xff]
    %v301 = vld [vmem:[%s242] sm:$0xff]
    %v302 = vmul.f32 %v297, 0.25
    %vm303 = vcmask 130048
    %v304 = vsel %vm303, %v302, -inf
    %305 = vmax.xlane.f32.xlu0 %v304
    %v306 = vpop.xlane.xlu0 %305
    %v307 = vsub.f32 %v302, %v306
    %v308 = vmul.f32 %v307, 1.442695
    %v309 = vpow.pop %v308
    %v310 = vsel %vm303, %v309, 0.0
    %311 = vadd.xlane.f32.xlu0 %v310
    %v312 = vpop.xlane.xlu0 %311
    %v313 = vlog2.pop %v312
    %v314 = vmul.f32 %v313, 0.6931472
    %v315 = vsub.f32 %v307, %v314
    %v316 = vmul.f32 %v296, 0.25
    %v317 = vsel %vm303, %v316, -inf
    %318 = vmax.xlane.f32.xlu0 %v317
    %v319 = vpop.xlane.xlu0 %318
    %v320 = vsub.f32 %v316, %v319
    %v321 = vmul.f32 %v320, 1.442695
    %v322 = vpow.pop %v321
    %v323 = vsel %vm303, %v322, 0.0
    %324 = vadd.xlane.f32.xlu0 %v323
    %v325 = vpop.xlane.xlu0 %324
    %v326 = vlog2.pop %v325
    %v327 = vmul.f32 %v326, 0.6931472
    %v328 = vsub.f32 %v320, %v327
    %v329 = vrcp.pop %v312
    %v330 = vmul.f32 %v312, %v329
    %v331 = vsub.f32 1.0, %v330
    %v332 = vmul.f32 %v329, %v331
    %v333 = vadd.f32 %v329, %v332
    %vm334 = vweird.f32 %v312
    %vm335 = vweird.f32 %v329
    %vm336 = vmor %vm334, %vm335
    %v337 = vsel %vm336, %v329, %v333
    %v338 = vand.u32 2147483647, %v312
    %vm339 = vcmp.eq.f32.partialorder %v338, 8.507059e+37
    %v340 = vand.u32 %v312, 2147483648
    %v341 = vor.u32 1.1754944e-38, %v340
    %v342 = vsel %vm339, %v341, %v337
    %v343 = vmul.f32 1.0, %v342
    %v344 = vsub.f32 %v315, %v328
    %v345 = vmul.f32 %v309, %v344
    %v346 = vmul.f32 %v345, %v343
    %v347 = vsel %vm295, 1, 0
    %vm348 = vcmp.eq.s32.totalorder %v347, 1
    %v349 = vsel %vm348, %v346, 0.0
    %v350 = vld [vmem:[#allocation2] sm:$0xff]
    %v351 = vadd.f32 %v349, 0.0
    %v352 = vadd.f32 %v350, %v351
    %353 = vst.msk [vmem:[#allocation2] sm:$0xff] %vm303, %v352
    %v354 = vsub.f32 %v298, %v299
    %v355 = vsel %vm348, %v354, 0.0
    %v356 = vmul.f32 %v355, %v355
    %v357 = vld [vmem:[#allocation3] sm:$0xff]
    %v358 = vadd.f32 %v356, 0.0
    %v359 = vadd.f32 %v357, %v358
    %vm360 = vcmask 31744
    %361 = vst.msk [vmem:[#allocation3] sm:$0xff] %vm360, %v359
    %v362 = vsub.f32 %v300, %v301
    %v363 = vsel %vm348, %v362, 0.0
    %v364 = vmul.f32 %v363, %v363
    %v365 = vld [vmem:[#allocation4] sm:$0xff]
    %v366 = vadd.f32 %v364, 0.0
    %v367 = vadd.f32 %v365, %v366
    %vm368 = vcmask 80896
    %369 = vst.msk [vmem:[#allocation4] sm:$0xff] %vm368, %v367
    %v370 = vsel %vm303, %v296, -inf
    %371 = vmax.xlane.f32.xlu0 %v370
    %v372 = vpop.xlane.xlu0 %371
    %v373 = vsub.f32 %v296, %v372
    %v374 = vmul.f32 %v373, 1.442695
    %v375 = vpow.pop %v374
    %v376 = vsel %vm303, %v375, 0.0
    %377 = vadd.xlane.f32.xlu0 %v376
    %v378 = vpop.xlane.xlu0 %377
    %v379 = vlog2.pop %v378
    %v380 = vmul.f32 %v379, 0.6931472
    %v381 = vsub.f32 %v373, %v380
    %v382 = vlaneseq
    %v383 = vand.u32 %v382, 127
    %v384 = vld [vmem:[%s252] sm:$0xff]
    %385 = vset.pattern.permute.xlu0 0
    %386 = vperm.xlu0 %385, %v384
    %v387 = vpop.permute.xlu0 %386
    %vm388 = vcmp.eq.s32.totalorder %v383, %v387
    %vm389 = vmand %vm388, %vm348
    %v390 = vsub.f32 0.0, %v381
    %v391 = vsel %vm389, %v390, 0.0
    %v392 = vld [vmem:[#allocation5] sm:$0xff]
    %v393 = vadd.f32 %v391, 0.0
    %v394 = vadd.f32 %v392, %v393
    %395 = vst.msk [vmem:[#allocation5] sm:$0xff] %vm303, %v394
    %v396 = vld [vmem:[%s262] sm:$0xff]
    %v397 = vsub.f32 %v298, %v396
    %v398 = vsel %vm348, %v397, 0.0
    %v399 = vand.u32 2147483647, %v398
    %vm400 = vcmp.lt.f32.partialorder %v399, 1.0
    %v401 = vmul.f32 %v398, 0.5
    %v402 = vmul.f32 %v401, %v398
    %v403 = vsub.f32 %v399, 0.5
    %v404 = vsel %vm400, %v402, %v403
    %v405 = vld [vmem:[#allocation6] sm:$0xff]
    %v406 = vadd.f32 %v404, 0.0
    %v407 = vadd.f32 %v405, %v406
    %408 = vst.msk [vmem:[#allocation6] sm:$0xff] %vm360, %v407
    %v409 = vld [vmem:[%s272] sm:$0xff]
    %v410 = vsub.f32 %v300, %v409
    %v411 = vsel %vm348, %v410, 0.0
    %v412 = vand.u32 2147483647, %v411
    %vm413 = vcmp.lt.f32.partialorder %v412, 1.0
    %v414 = vmul.f32 %v411, 0.5
    %v415 = vmul.f32 %v414, %v411
    %v416 = vsub.f32 %v412, 0.5
    %v417 = vsel %vm413, %v415, %v416
    %v418 = vld [vmem:[#allocation7] sm:$0xff]
    %v419 = vadd.f32 %v417, 0.0
    %v420 = vadd.f32 %v418, %v419
    %421 = vst.msk [vmem:[#allocation7] sm:$0xff] %vm368, %v420
    // Predicated region
    $region42: #{tpu_custom_call.1} parent=1 // pred_check
      %p422 = pneg %p276
    $region43: #{tpu_custom_call.1} parent=1 // pred_check_branch
      %424 = sbr.rel (%p422) target = $region45
    $region44: #{tpu_custom_call.1} parent=1 // pred_region
      %v425 = vld [vmem:[#allocation2] sm:$0xff]
      %v426 = vsel %vm303, %v425, 0.0
      %427 = vadd.xlane.f32.xlu0 %v426
      %v428 = vpop.xlane.xlu0 %427
      %v429 = vrot.slane %v428, 4
      %v430 = vadd.f32 %v428, %v429
      %v431 = vrot.slane %v430, 2
      %v432 = vadd.f32 %v430, %v431
      %v433 = vrot.slane %v432, 1
      %v434 = vadd.f32 %v432, %v433
      %s435 = vtos %v434
      %v436 = vld [vmem:[#allocation3] sm:$0xff]
      %v437 = vsel %vm360, %v436, 0.0
      %438 = vadd.xlane.f32.xlu0 %v437
      %v439 = vpop.xlane.xlu0 %438
      %v440 = vrot.slane %v439, 4
      %v441 = vadd.f32 %v439, %v440
      %v442 = vrot.slane %v441, 2
      %v443 = vadd.f32 %v441, %v442
      %v444 = vrot.slane %v443, 1
      %v445 = vadd.f32 %v443, %v444
      %s446 = vtos %v445
      %v447 = vld [vmem:[#allocation4] sm:$0xff]
      %v448 = vsel %vm368, %v447, 0.0
      %449 = vadd.xlane.f32.xlu0 %v448
      %v450 = vpop.xlane.xlu0 %449
      %v451 = vrot.slane %v450, 4
      %v452 = vadd.f32 %v450, %v451
      %v453 = vrot.slane %v452, 2
      %v454 = vadd.f32 %v452, %v453
      %v455 = vrot.slane %v454, 1
      %v456 = vadd.f32 %v454, %v455
      %s457 = vtos %v456
      %v458 = vld [vmem:[#allocation5] sm:$0xff]
      %v459 = vsel %vm303, %v458, 0.0
      %460 = vadd.xlane.f32.xlu0 %v459
      %v461 = vpop.xlane.xlu0 %460
      %v462 = vrot.slane %v461, 4
      %v463 = vadd.f32 %v461, %v462
      %v464 = vrot.slane %v463, 2
      %v465 = vadd.f32 %v463, %v464
      %v466 = vrot.slane %v465, 1
      %v467 = vadd.f32 %v465, %v466
      %s468 = vtos %v467
      %v469 = vld [vmem:[#allocation6] sm:$0xff]
      %v470 = vsel %vm360, %v469, 0.0
      %471 = vadd.xlane.f32.xlu0 %v470
      %v472 = vpop.xlane.xlu0 %471
      %v473 = vrot.slane %v472, 4
      %v474 = vadd.f32 %v472, %v473
      %v475 = vrot.slane %v474, 2
      %v476 = vadd.f32 %v474, %v475
      %v477 = vrot.slane %v476, 1
      %v478 = vadd.f32 %v476, %v477
      %s479 = vtos %v478
      %v480 = vld [vmem:[#allocation7] sm:$0xff]
      %v481 = vsel %vm368, %v480, 0.0
      %482 = vadd.xlane.f32.xlu0 %v481
      %v483 = vpop.xlane.xlu0 %482
      %v484 = vrot.slane %v483, 4
      %v485 = vadd.f32 %v483, %v484
      %v486 = vrot.slane %v485, 2
      %v487 = vadd.f32 %v485, %v486
      %v488 = vrot.slane %v487, 1
      %v489 = vadd.f32 %v487, %v488
      %s490 = vtos %v489
      %vm491 = vcmp.eq.s32.totalorder %v383, 0
      %v492 = vstv %s435
      %v493 = vsel %vm491, %v492, 0.0
      %v494 = vadd.f32 %v493, 0.0
      %vm495 = vcmp.eq.s32.totalorder %v383, 1
      %v496 = vstv %s446
      %v497 = vsel %vm495, %v496, 0.0
      %v498 = vadd.f32 %v494, %v497
      %vm499 = vcmp.eq.s32.totalorder %v383, 2
      %v500 = vstv %s457
      %v501 = vsel %vm499, %v500, 0.0
      %v502 = vadd.f32 %v498, %v501
      %vm503 = vcmp.eq.s32.totalorder %v383, 3
      %v504 = vstv %s468
      %v505 = vsel %vm503, %v504, 0.0
      %v506 = vadd.f32 %v502, %v505
      %vm507 = vcmp.eq.s32.totalorder %v383, 4
      %v508 = vstv %s479
      %v509 = vsel %vm507, %v508, 0.0
      %v510 = vadd.f32 %v506, %v509
      %vm511 = vcmp.eq.s32.totalorder %v383, 5
      %v512 = vstv %s490
      %v513 = vsel %vm511, %v512, 0.0
      %v514 = vadd.f32 %v510, %v513
      %vm515 = vcmask 57344
      %516 = vst.msk [vmem:[#allocation8] sm:$0x1] %vm515, %v514
    $region45: #{tpu_custom_call.1} parent=1 // pred_fallthru
      _
    // Predicated region
    $region46: #{tpu_custom_call.1} parent=1 // pred_check
      _
    $region47: #{tpu_custom_call.1} parent=1 // pred_check_branch
      %518 = sbr.rel (0) target = $region49
    $region48: #{tpu_custom_call.1} parent=1 // pred_region
      %520 = vsyncadd [#allocation9], 0
      %s522 = sshll.u32 [#allocation8], 4
      %s523 = int_to_ptr.vmem [resolvable:$true] %s522
      %s524 = sshll.u32 %s9, 4
      %s525 = int_to_ptr.hbm [resolvable:$true] %s524
      %527 = dma.vmem_to_hbm [thread:$0]  %s523, 16, %s525, [#allocation9]
    $region49: #{tpu_custom_call.1} parent=1 // pred_fallthru
      _
    // Predicated region
    $region50: #{tpu_custom_call.1} parent=1 // pred_check
      _
    $region51: #{tpu_custom_call.1} parent=1 // pred_check_branch
      %529 = sbr.rel (0) target = $region53
    $region52: #{tpu_custom_call.1} parent=1 // pred_region
      %531 = dma.done [#allocation9], 16
    $region53: #{tpu_custom_call.1} parent=1 // pred_fallthru
      _
    %532 = vsyncpa [#allocation9], 1

</llo_original>
